<compile_context>
chip_gen: v6e
topology: v6e:2x2x1
jax: 0.10.0
libtpu: 0.0.40
codegen_flags: <defaults>
</compile_context>

<pallas_src>
import functools

import jax
import jax.numpy as jnp
from jax.experimental import pallas as pl
from jax.experimental.pallas import tpu as pltpu


def _cdiv(a, b):
    return -(-a // b)


def _round_up(a, m):
    return _cdiv(a, m) * m


def _fused_linear_kernel(x_ref, w_ref, b_ref, o_ref):
    # bf16 x bf16 -> f32 MXU matmul; bias added in f32; unpadded masked store.
    x = x_ref[...].astype(jnp.bfloat16)
    y = jnp.dot(x, w_ref[...], preferred_element_type=jnp.float32)
    o_ref[...] = (y + b_ref[...]).astype(o_ref.dtype)


def init_params(key, image_w, image_h, classes):
    """nn.Linear-style init U(-1/sqrt(fan_in), 1/sqrt(fan_in)); weights stored (in, out)."""
    d_in = image_w * image_h * 3
    dims = [(d_in, 512), (512, 256), (256, classes)]
    params = {}
    keys = jax.random.split(key, 2 * len(dims))
    for i, (fi, fo) in enumerate(dims):
        bound = float(1.0 / (fi ** 0.5))
        params[f"w{i+1}"] = jax.random.uniform(
            keys[2 * i], (fi, fo), jnp.float32, -bound, bound)
        params[f"b{i+1}"] = jax.random.uniform(
            keys[2 * i + 1], (fo,), jnp.float32, -bound, bound)
    return params


def fuse_params(params, classes):
    """One-time algebraic fold of the three linears (f32, HIGHEST), weight stored bf16."""
    # NOTE: fusing is a bandwidth win only while `classes` <= the intermediate
    # widths (here 256); for very wide heads keep the layers separate.
    hp = jax.lax.Precision.HIGHEST
    w = jnp.dot(jnp.dot(params["w1"], params["w2"], precision=hp),
                params["w3"], precision=hp)                            # (D, classes) f32
    b = jnp.dot(jnp.dot(params["b1"], params["w2"], precision=hp) + params["b2"],
                params["w3"], precision=hp) + params["b3"]             # (classes,)  f32
    return {"w": w.astype(jnp.bfloat16),                # halve weight HBM/DMA bytes
            "b": b.reshape(1, classes).astype(jnp.float32)}            # bias kept f32


def _choose_batch_tile(B, D):
    """Batch tile: big enough to amortize ~0.35 us/step, small enough for VMEM + megacore."""
    if B <= 256:
        return B  # tiny/medium batch: one block; launch/DMA-overhead bound.
    # (a) double-buffered f32 x tile within ~12 MiB of the 32 MiB default scoped VMEM
    vmem_rows = max(8, (((12 << 20) // (2 * 4 * D)) // 8) * 8)
    # (b) keep >= 2 grid steps so both v7x TensorCores get work
    half_b = _round_up(_cdiv(B, 2), 8)
    # (c) cap at 1024 rows (beyond ~512-1024 the per-step overhead is already amortized)
    return max(8, min(1024, vmem_rows, half_b))


@functools.partial(jax.jit, static_argnames=("classes",))
def small_fully_c_forward(x_nchw, fused, classes):
    """x_nchw: [B, 3, H, W] float32; fused: dict from fuse_params; returns [B, classes] f32."""
    B = x_nchw.shape[0]
    D = x_nchw.size // B
    x = x_nchw.reshape(B, D)                  # == x.view(-1, nelement/B); no padding copy

    w, b = fused["w"], fused["b"]             # (D, classes) bf16, (1, classes) f32

    TB = _choose_batch_tile(B, D)
    grid = (pl.cdiv(B, TB),)

    # TODO(synk): if D*classes ever grows so the resident (double-buffered) fused
    # weight no longer fits the 32 MiB default scoped-VMEM budget (same default on
    # v5e/v6e/v7x; v7x physical VMEM is only 64 MiB), add a trailing "arbitrary"
    # K grid axis with a pltpu.VMEM((TB, classes), f32) accumulator
    # (pl.when(k==0) init / k==last writeback), stream (tk, classes) weight tiles
    # with pipeline_mode=pl.Buffered(2-3), and single-buffer the invariant bias.
    return pl.pallas_call(
        _fused_linear_kernel,
        out_shape=jax.ShapeDtypeStruct((B, classes), jnp.float32),
        grid=grid,
        in_specs=[
            pl.BlockSpec((TB, D), lambda i: (i, 0)),          # x tile (streamed per step)
            pl.BlockSpec((D, classes), lambda i: (0, 0)),     # fused bf16 weight (resident)
            pl.BlockSpec((1, classes), lambda i: (0, 0)),     # fused f32 bias (resident)
        ],
        # Unpadded output: no post-kernel slice / extra HBM round trip; OOB rows
        # of a partial last batch block are never written back.
        out_specs=pl.BlockSpec((TB, classes), lambda i: (i, 0)),
        compiler_params=pltpu.CompilerParams(
            # Batch axis is embarrassingly parallel -> shards across v7x's 2 TCs.
            dimension_semantics=("parallel",)),
    )(x, w, b)


def _ref_forward_f32(params, xf):
    hp = jax.lax.Precision.HIGHEST
    h = jnp.dot(xf, params["w1"], precision=hp) + params["b1"]
    h = jnp.dot(h, params["w2"], precision=hp) + params["b2"]
    return jnp.dot(h, params["w3"], precision=hp) + params["b3"]


if __name__ == "__main__":
    image_W, image_H, classes = 16, 16, 10
    B = 2

    key = jax.random.PRNGKey(0)
    kx, kp, kx2 = jax.random.split(key, 3)
    x = jax.random.normal(kx, (B, 3, image_H, image_W), jnp.float32)

    params = init_params(kp, image_W, image_H, classes)
    fused = fuse_params(params, classes)          # one-time fold + bf16 cast (not per call)

    # --- tiny-batch path (single block) ---
    y = jax.block_until_ready(small_fully_c_forward(x, fused, classes))
    assert y.shape == (B, classes)

    xf = x.reshape(B, -1)

    # Check 1: kernel vs plain-JAX using the SAME bf16 fused weights (kernel mechanics).
    ref_fused = (jnp.dot(xf.astype(jnp.bfloat16), fused["w"],
                         preferred_element_type=jnp.float32) + fused["b"])
    assert jnp.allclose(y, ref_fused, atol=1e-3, rtol=1e-3), \
        float(jnp.max(jnp.abs(y - ref_fused)))

    # Check 2: kernel vs the original SmallFullyC f32 3-matmul forward
    # (fold correctness + bf16 weight quantization; hence the looser tolerance).
    ref = _ref_forward_f32(params, xf)
    assert jnp.allclose(y, ref, atol=2e-2, rtol=2e-2), \
        float(jnp.max(jnp.abs(y - ref)))

    # --- large-batch path (multi-step, partial last block, megacore split) ---
    B2 = 600
    x2 = jax.random.normal(kx2, (B2, 3, image_H, image_W), jnp.float32)
    y2 = jax.block_until_ready(small_fully_c_forward(x2, fused, classes))
    assert y2.shape == (B2, classes)
    ref2 = _ref_forward_f32(params, x2.reshape(B2, -1))
    assert jnp.allclose(y2, ref2, atol=2e-2, rtol=2e-2), \
        float(jnp.max(jnp.abs(y2 - ref2)))

    print("KERNEL_OK")
</pallas_src>

<mosaic_0001>
module attributes {stable_mosaic.version = 11 : i64} {
  func.func @_fused_linear_kernel(%arg0: i32, %arg1: memref<2x768xf32, #tpu.memory_space<vmem>>, %arg2: memref<768x10xbf16, #tpu.memory_space<vmem>>, %arg3: memref<1x10xf32, #tpu.memory_space<vmem>>, %arg4: memref<2x10xf32, #tpu.memory_space<vmem>>) attributes {dimension_semantics = [#tpu.dimension_semantics<parallel>], iteration_bounds = array<i64: 1>, scalar_prefetch = 0 : i64, scratch_operands = 0 : i64, tpu.core_type = #tpu.core_type<tc>, window_params = [{transform_indices = @transform_0, window_bounds = array<i64: 2, 768>}, {pipeline_mode = #tpu.pipeline_mode<synchronous>, transform_indices = @transform_1, window_bounds = array<i64: 768, 10>}, {pipeline_mode = #tpu.pipeline_mode<synchronous>, transform_indices = @transform_2, window_bounds = array<i64: 1, 10>}, {transform_indices = @transform_3, window_bounds = array<i64: 2, 10>}]} {
    %c0 = arith.constant 0 : index
    %c0_0 = arith.constant 0 : index
    %0 = vector.load %arg1[%c0, %c0_0] : memref<2x768xf32, #tpu.memory_space<vmem>>, vector<2x768xf32>
    %1 = arith.truncf %0 : vector<2x768xf32> to vector<2x768xbf16>
    %c0_1 = arith.constant 0 : index
    %c0_2 = arith.constant 0 : index
    %2 = vector.load %arg2[%c0_1, %c0_2] : memref<768x10xbf16, #tpu.memory_space<vmem>>, vector<768x10xbf16>
    %cst = arith.constant dense<0.000000e+00> : vector<2x10xf32>
    %3 = tpu.matmul %1, %2, %cst {dimension_numbers = #tpu.dot_dimension_numbers<[1], [0], [0], [1], [0, 0, 1, 1], [], []>} : vector<2x768xbf16>, vector<768x10xbf16>, vector<2x10xf32> -> vector<2x10xf32>
    %c0_3 = arith.constant 0 : index
    %c0_4 = arith.constant 0 : index
    %4 = vector.load %arg3[%c0_3, %c0_4] : memref<1x10xf32, #tpu.memory_space<vmem>>, vector<1x10xf32>
    %5 = vector.broadcast %4 : vector<1x10xf32> to vector<2x10xf32>
    %6 = arith.addf %3, %5 : vector<2x10xf32>
    %c0_5 = arith.constant 0 : index
    %c0_6 = arith.constant 0 : index
    %7 = vector.load %arg4[%c0_5, %c0_6] : memref<2x10xf32, #tpu.memory_space<vmem>>, vector<2x10xf32>
    tpu.vector_store %arg4[%c0_5, %c0_6], %6 {strides = array<i32>} : memref<2x10xf32, #tpu.memory_space<vmem>>, vector<2x10xf32>,
    return
  }
  func.func @transform_0(%arg0: i32) -> (i32, i32) {
    %c0_i32 = arith.constant 0 : i32
    %c0_i32_0 = arith.constant 0 : i32
    return %arg0, %c0_i32 : i32, i32
  }
  func.func @transform_1(%arg0: i32) -> (i32, i32) {
    %c0_i32 = arith.constant 0 : i32
    %c0_i32_0 = arith.constant 0 : i32
    %c0_i32_1 = arith.constant 0 : i32
    return %c0_i32, %c0_i32_0 : i32, i32
  }
  func.func @transform_2(%arg0: i32) -> (i32, i32) {
    %c0_i32 = arith.constant 0 : i32
    %c0_i32_0 = arith.constant 0 : i32
    %c0_i32_1 = arith.constant 0 : i32
    return %c0_i32, %c0_i32_0 : i32, i32
  }
  func.func @transform_3(%arg0: i32) -> (i32, i32) {
    %c0_i32 = arith.constant 0 : i32
    %c0_i32_0 = arith.constant 0 : i32
    return %arg0, %c0_i32 : i32, i32
  }
}

</mosaic_0001>

<llo_original>
// kernel: small_fully_c_forward.1
$region0: #{small_fully_c_forward.1}
  #allocation0 [shape = 'u32[]', space=smem, size = 0x4, offset = 0x4, fixed_abs, tag = 'smem constant byte address 0x4 - core index']
  #allocation1 [shape = 'u32[144,128]{1,0:T(1,128)}', space=vmem, size = 0x12000, scoped, tag = 'internal scratch']
  %s0 = inlined_call_operand.vmem [shape: f32[2,768], index: 0, kind: input, shape index: {}]
  %s1 = inlined_call_operand.vmem [shape: bf16[768,10], index: 1, kind: input, shape index: {}]
  %s2 = inlined_call_operand.vmem [shape: f32[1,10], index: 2, kind: input, shape index: {}]
  %s3 = inlined_call_operand.hbm [shape: f32[2,10], index: 3, kind: output, shape index: {}]
  %s4 = sld [smem:[#allocation0]]
  $region22: #{small_fully_c_forward.1} parent=0
    _
  %s6 = ssub.s32 1, %s4
  %s7 = scalar_select 0, %s6, %s4
  $region1: #{small_fully_c_forward.1} parent=0
    #allocation2 [shape = 'u8[1024]{0}', space=vmem, size = 0x400, scoped, tag = 'output window, operand 0, single buffered']
    #allocation3 [shape = 's32[1]{0}', space=sflag, size = 0x4, scoped, tag = 'scoped memory for small_fully_c_forward.1']
    %8 = vsyncpa [#allocation3], 0
    // Predicated region
    $region2: #{small_fully_c_forward.1} parent=1 // pred_check
      _
    $region3: #{small_fully_c_forward.1} parent=1 // pred_check_branch
      %10 = sbr.rel (0) target = $region5
    $region4: #{small_fully_c_forward.1} parent=1 // pred_region
      _
    $region5: #{small_fully_c_forward.1} parent=1 // pred_fallthru
      _
    // Predicated region
    $region6: #{small_fully_c_forward.1} parent=1 // pred_check
      _
    $region7: #{small_fully_c_forward.1} parent=1 // pred_check_branch
      %12 = sbr.rel (0) target = $region9
    $region8: #{small_fully_c_forward.1} parent=1 // pred_region
      _
    $region9: #{small_fully_c_forward.1} parent=1 // pred_fallthru
      _
    // Predicated region
    $region10: #{small_fully_c_forward.1} parent=1 // pred_check
      _
    $region11: #{small_fully_c_forward.1} parent=1 // pred_check_branch
      %14 = sbr.rel (0) target = $region13
    $region12: #{small_fully_c_forward.1} parent=1 // pred_region
      _
    $region13: #{small_fully_c_forward.1} parent=1 // pred_fallthru
      _
    %v16 = vld [vmem:[%s0] sm:$0xff]
    %v17 = vld [vmem:[%s0 + $0x8] sm:$0xf]
    %v20 = vcombine.high %v16, %v16
    %v22 = vunpack.c.l.s4 1983009808
    %v23 = vunpack.c.0.s8 %v22
    %v24 = vlaneseq
    %v25 = vshrl.u32 %v24, 7
    %v26 = vsub.s32 %v23, %v25
    %v27 = vrot.slane %v16, %v26
    %v29 = vunpack.c.l.s4 1983009808
    %v30 = vunpack.c.0.s8 %v29
    %v31 = vlaneseq
    %v32 = vshrl.u32 %v31, 7
    %v33 = vsub.s32 %v30, %v32
    %v34 = vrot.slane %v20, %v33
    %v35 = vcombine.high %v27, %v27
    %v36 = vcombine.high %v34, %v34
    %v38 = vunpack.c.l.s4 1983009808
    %v39 = vunpack.c.0.s8 %v38
    %v40 = vlaneseq
    %v41 = vshrl.u32 %v40, 7
    %v42 = vsub.s32 %v39, %v41
    %v43 = vrot.slane %v17, %v42
    %v44 = vcombine.high %v43, %v43
    %v51 = vpack.c.bf16 %v27, %v27
    %v52 = vpack.c.bf16 %v35, %v35
    %v53 = vpack.c.bf16 %v34, %v34
    %v54 = vpack.c.bf16 %v36, %v36
    %v55 = vpack.c.bf16 %v43, %v43
    %v56 = vpack.c.bf16 %v44, %v44
    %v57 = vld [vmem:[%s1] sm:$0xf]
    %v58 = vld [vmem:[%s1 + $0x4] sm:$0xf]
    %v59 = vld [vmem:[%s1 + $0x8] sm:$0xf]
    %v60 = vld [vmem:[%s1 + $0xc] sm:$0xf]
    %v61 = vld [vmem:[%s1 + $0x10] sm:$0xf]
    %v62 = vld [vmem:[%s1 + $0x14] sm:$0xf]
    %v63 = vld [vmem:[%s1 + $0x18] sm:$0xf]
    %v64 = vld [vmem:[%s1 + $0x1c] sm:$0xf]
    %v65 = vld [vmem:[%s1 + $0x20] sm:$0xf]
    %v66 = vld [vmem:[%s1 + $0x24] sm:$0xf]
    %v67 = vld [vmem:[%s1 + $0x28] sm:$0xf]
    %v68 = vld [vmem:[%s1 + $0x2c] sm:$0xf]
    %v69 = vld [vmem:[%s1 + $0x30] sm:$0xf]
    %v70 = vld [vmem:[%s1 + $0x34] sm:$0xf]
    %v71 = vld [vmem:[%s1 + $0x38] sm:$0xf]
    %v72 = vld [vmem:[%s1 + $0x3c] sm:$0xf]
    %v73 = vld [vmem:[%s1 + $0x40] sm:$0xf]
    %v74 = vld [vmem:[%s1 + $0x44] sm:$0xf]
    %v75 = vld [vmem:[%s1 + $0x48] sm:$0xf]
    %v76 = vld [vmem:[%s1 + $0x4c] sm:$0xf]
    %v77 = vld [vmem:[%s1 + $0x50] sm:$0xf]
    %v78 = vld [vmem:[%s1 + $0x54] sm:$0xf]
    %v79 = vld [vmem:[%s1 + $0x58] sm:$0xf]
    %v80 = vld [vmem:[%s1 + $0x5c] sm:$0xf]
    %v81 = vld [vmem:[%s1 + $0x60] sm:$0xf]
    %v82 = vld [vmem:[%s1 + $0x64] sm:$0xf]
    %v83 = vld [vmem:[%s1 + $0x68] sm:$0xf]
    %v84 = vld [vmem:[%s1 + $0x6c] sm:$0xf]
    %v85 = vld [vmem:[%s1 + $0x70] sm:$0xf]
    %v86 = vld [vmem:[%s1 + $0x74] sm:$0xf]
    %v87 = vld [vmem:[%s1 + $0x78] sm:$0xf]
    %v88 = vld [vmem:[%s1 + $0x7c] sm:$0xf]
    %v89 = vld [vmem:[%s1 + $0x80] sm:$0xf]
    %v90 = vld [vmem:[%s1 + $0x84] sm:$0xf]
    %v91 = vld [vmem:[%s1 + $0x88] sm:$0xf]
    %v92 = vld [vmem:[%s1 + $0x8c] sm:$0xf]
    %v93 = vld [vmem:[%s1 + $0x90] sm:$0xf]
    %v94 = vld [vmem:[%s1 + $0x94] sm:$0xf]
    %v95 = vld [vmem:[%s1 + $0x98] sm:$0xf]
    %v96 = vld [vmem:[%s1 + $0x9c] sm:$0xf]
    %v97 = vld [vmem:[%s1 + $0xa0] sm:$0xf]
    %v98 = vld [vmem:[%s1 + $0xa4] sm:$0xf]
    %v99 = vld [vmem:[%s1 + $0xa8] sm:$0xf]
    %v100 = vld [vmem:[%s1 + $0xac] sm:$0xf]
    %v101 = vld [vmem:[%s1 + $0xb0] sm:$0xf]
    %v102 = vld [vmem:[%s1 + $0xb4] sm:$0xf]
    %v103 = vld [vmem:[%s1 + $0xb8] sm:$0xf]
    %v104 = vld [vmem:[%s1 + $0xbc] sm:$0xf]
    %v105 = vld [vmem:[%s1 + $0xc0] sm:$0xf]
    %v106 = vld [vmem:[%s1 + $0xc4] sm:$0xf]
    %v107 = vld [vmem:[%s1 + $0xc8] sm:$0xf]
    %v108 = vld [vmem:[%s1 + $0xcc] sm:$0xf]
    %v109 = vld [vmem:[%s1 + $0xd0] sm:$0xf]
    %v110 = vld [vmem:[%s1 + $0xd4] sm:$0xf]
    %v111 = vld [vmem:[%s1 + $0xd8] sm:$0xf]
    %v112 = vld [vmem:[%s1 + $0xdc] sm:$0xf]
    %v113 = vld [vmem:[%s1 + $0xe0] sm:$0xf]
    %v114 = vld [vmem:[%s1 + $0xe4] sm:$0xf]
    %v115 = vld [vmem:[%s1 + $0xe8] sm:$0xf]
    %v116 = vld [vmem:[%s1 + $0xec] sm:$0xf]
    %v117 = vld [vmem:[%s1 + $0xf0] sm:$0xf]
    %v118 = vld [vmem:[%s1 + $0xf4] sm:$0xf]
    %v119 = vld [vmem:[%s1 + $0xf8] sm:$0xf]
    %v120 = vld [vmem:[%s1 + $0xfc] sm:$0xf]
    %v121 = vld [vmem:[%s1 + $0x100] sm:$0xf]
    %v122 = vld [vmem:[%s1 + $0x104] sm:$0xf]
    %v123 = vld [vmem:[%s1 + $0x108] sm:$0xf]
    %v124 = vld [vmem:[%s1 + $0x10c] sm:$0xf]
    %v125 = vld [vmem:[%s1 + $0x110] sm:$0xf]
    %v126 = vld [vmem:[%s1 + $0x114] sm:$0xf]
    %v127 = vld [vmem:[%s1 + $0x118] sm:$0xf]
    %v128 = vld [vmem:[%s1 + $0x11c] sm:$0xf]
    %v129 = vld [vmem:[%s1 + $0x120] sm:$0xf]
    %v130 = vld [vmem:[%s1 + $0x124] sm:$0xf]
    %v131 = vld [vmem:[%s1 + $0x128] sm:$0xf]
    %v132 = vld [vmem:[%s1 + $0x12c] sm:$0xf]
    %v133 = vld [vmem:[%s1 + $0x130] sm:$0xf]
    %v134 = vld [vmem:[%s1 + $0x134] sm:$0xf]
    %v135 = vld [vmem:[%s1 + $0x138] sm:$0xf]
    %v136 = vld [vmem:[%s1 + $0x13c] sm:$0xf]
    %v137 = vld [vmem:[%s1 + $0x140] sm:$0xf]
    %v138 = vld [vmem:[%s1 + $0x144] sm:$0xf]
    %v139 = vld [vmem:[%s1 + $0x148] sm:$0xf]
    %v140 = vld [vmem:[%s1 + $0x14c] sm:$0xf]
    %v141 = vld [vmem:[%s1 + $0x150] sm:$0xf]
    %v142 = vld [vmem:[%s1 + $0x154] sm:$0xf]
    %v143 = vld [vmem:[%s1 + $0x158] sm:$0xf]
    %v144 = vld [vmem:[%s1 + $0x15c] sm:$0xf]
    %v145 = vld [vmem:[%s1 + $0x160] sm:$0xf]
    %v146 = vld [vmem:[%s1 + $0x164] sm:$0xf]
    %v147 = vld [vmem:[%s1 + $0x168] sm:$0xf]
    %v148 = vld [vmem:[%s1 + $0x16c] sm:$0xf]
    %v149 = vld [vmem:[%s1 + $0x170] sm:$0xf]
    %v150 = vld [vmem:[%s1 + $0x174] sm:$0xf]
    %v151 = vld [vmem:[%s1 + $0x178] sm:$0xf]
    %v152 = vld [vmem:[%s1 + $0x17c] sm:$0xf]
    %v153 = vld [vmem:[%s2] sm:$0x1]
    %v155 = vlaneseq
    %v156 = vshrl.u32 %v155, 7
    %v157 = vsub.s32 0, %v156
    %v158 = vrot.slane %v153, %v157
    %v256 = vunpack.c.l.b16 %v57
    %v257 = vunpack.c.l.b16 %v58
    %v258 = vunpack.c.l.b16 %v59
    %v259 = vunpack.c.l.b16 %v60
    %v260 = vunpack.c.l.b16 %v61
    %v261 = vunpack.c.l.b16 %v62
    %v262 = vunpack.c.l.b16 %v63
    %v263 = vunpack.c.l.b16 %v64
    %v264 = vunpack.c.l.b16 %v65
    %v265 = vunpack.c.l.b16 %v66
    %v266 = vunpack.c.l.b16 %v67
    %v267 = vunpack.c.l.b16 %v68
    %v268 = vunpack.c.l.b16 %v69
    %v269 = vunpack.c.l.b16 %v70
    %v270 = vunpack.c.l.b16 %v71
    %v271 = vunpack.c.l.b16 %v72
    %v272 = vunpack.c.l.b16 %v73
    %v273 = vunpack.c.l.b16 %v74
    %v274 = vunpack.c.l.b16 %v75
    %v275 = vunpack.c.l.b16 %v76
    %v276 = vunpack.c.l.b16 %v77
    %v277 = vunpack.c.l.b16 %v78
    %v278 = vunpack.c.l.b16 %v79
    %v279 = vunpack.c.l.b16 %v80
    %v280 = vunpack.c.l.b16 %v81
    %v281 = vunpack.c.l.b16 %v82
    %v282 = vunpack.c.l.b16 %v83
    %v283 = vunpack.c.l.b16 %v84
    %v284 = vunpack.c.l.b16 %v85
    %v285 = vunpack.c.l.b16 %v86
    %v286 = vunpack.c.l.b16 %v87
    %v287 = vunpack.c.l.b16 %v88
    %v288 = vunpack.c.l.b16 %v89
    %v289 = vunpack.c.l.b16 %v90
    %v290 = vunpack.c.l.b16 %v91
    %v291 = vunpack.c.l.b16 %v92
    %v292 = vunpack.c.l.b16 %v93
    %v293 = vunpack.c.l.b16 %v94
    %v294 = vunpack.c.l.b16 %v95
    %v295 = vunpack.c.l.b16 %v96
    %v296 = vunpack.c.l.b16 %v97
    %v297 = vunpack.c.l.b16 %v98
    %v298 = vunpack.c.l.b16 %v99
    %v299 = vunpack.c.l.b16 %v100
    %v300 = vunpack.c.l.b16 %v101
    %v301 = vunpack.c.l.b16 %v102
    %v302 = vunpack.c.l.b16 %v103
    %v303 = vunpack.c.l.b16 %v104
    %v304 = vunpack.c.l.b16 %v105
    %v305 = vunpack.c.l.b16 %v106
    %v306 = vunpack.c.l.b16 %v107
    %v307 = vunpack.c.l.b16 %v108
    %v308 = vunpack.c.l.b16 %v109
    %v309 = vunpack.c.l.b16 %v110
    %v310 = vunpack.c.l.b16 %v111
    %v311 = vunpack.c.l.b16 %v112
    %v312 = vunpack.c.l.b16 %v113
    %v313 = vunpack.c.l.b16 %v114
    %v314 = vunpack.c.l.b16 %v115
    %v315 = vunpack.c.l.b16 %v116
    %v316 = vunpack.c.l.b16 %v117
    %v317 = vunpack.c.l.b16 %v118
    %v318 = vunpack.c.l.b16 %v119
    %v319 = vunpack.c.l.b16 %v120
    %v320 = vunpack.c.l.b16 %v121
    %v321 = vunpack.c.l.b16 %v122
    %v322 = vunpack.c.l.b16 %v123
    %v323 = vunpack.c.l.b16 %v124
    %v324 = vunpack.c.l.b16 %v125
    %v325 = vunpack.c.l.b16 %v126
    %v326 = vunpack.c.l.b16 %v127
    %v327 = vunpack.c.l.b16 %v128
    %v328 = vunpack.c.l.b16 %v129
    %v329 = vunpack.c.l.b16 %v130
    %v330 = vunpack.c.l.b16 %v131
    %v331 = vunpack.c.l.b16 %v132
    %v332 = vunpack.c.l.b16 %v133
    %v333 = vunpack.c.l.b16 %v134
    %v334 = vunpack.c.l.b16 %v135
    %v335 = vunpack.c.l.b16 %v136
    %v336 = vunpack.c.l.b16 %v137
    %v337 = vunpack.c.l.b16 %v138
    %v338 = vunpack.c.l.b16 %v139
    %v339 = vunpack.c.l.b16 %v140
    %v340 = vunpack.c.l.b16 %v141
    %v341 = vunpack.c.l.b16 %v142
    %v342 = vunpack.c.l.b16 %v143
    %v343 = vunpack.c.l.b16 %v144
    %v344 = vunpack.c.l.b16 %v145
    %v345 = vunpack.c.l.b16 %v146
    %v346 = vunpack.c.l.b16 %v147
    %v347 = vunpack.c.l.b16 %v148
    %v348 = vunpack.c.l.b16 %v149
    %v349 = vunpack.c.l.b16 %v150
    %v350 = vunpack.c.l.b16 %v151
    %v351 = vunpack.c.l.b16 %v152
    %v352 = vpack.c.b16 %v257, %v256
    %v353 = vpack.c.b16 %v259, %v258
    %v354 = vpack.c.b16 %v261, %v260
    %v355 = vpack.c.b16 %v263, %v262
    %v356 = vpack.c.b16 %v265, %v264
    %v357 = vpack.c.b16 %v267, %v266
    %v358 = vpack.c.b16 %v269, %v268
    %v359 = vpack.c.b16 %v271, %v270
    %v360 = vpack.c.b16 %v273, %v272
    %v361 = vpack.c.b16 %v275, %v274
    %v362 = vpack.c.b16 %v277, %v276
    %v363 = vpack.c.b16 %v279, %v278
    %v364 = vpack.c.b16 %v281, %v280
    %v365 = vpack.c.b16 %v283, %v282
    %v366 = vpack.c.b16 %v285, %v284
    %v367 = vpack.c.b16 %v287, %v286
    %v368 = vpack.c.b16 %v289, %v288
    %v369 = vpack.c.b16 %v291, %v290
    %v370 = vpack.c.b16 %v293, %v292
    %v371 = vpack.c.b16 %v295, %v294
    %v372 = vpack.c.b16 %v297, %v296
    %v373 = vpack.c.b16 %v299, %v298
    %v374 = vpack.c.b16 %v301, %v300
    %v375 = vpack.c.b16 %v303, %v302
    %v376 = vpack.c.b16 %v305, %v304
    %v377 = vpack.c.b16 %v307, %v306
    %v378 = vpack.c.b16 %v309, %v308
    %v379 = vpack.c.b16 %v311, %v310
    %v380 = vpack.c.b16 %v313, %v312
    %v381 = vpack.c.b16 %v315, %v314
    %v382 = vpack.c.b16 %v317, %v316
    %v383 = vpack.c.b16 %v319, %v318
    %v384 = vpack.c.b16 %v321, %v320
    %v385 = vpack.c.b16 %v323, %v322
    %v386 = vpack.c.b16 %v325, %v324
    %v387 = vpack.c.b16 %v327, %v326
    %v388 = vpack.c.b16 %v329, %v328
    %v389 = vpack.c.b16 %v331, %v330
    %v390 = vpack.c.b16 %v333, %v332
    %v391 = vpack.c.b16 %v335, %v334
    %v392 = vpack.c.b16 %v337, %v336
    %v393 = vpack.c.b16 %v339, %v338
    %v394 = vpack.c.b16 %v341, %v340
    %v395 = vpack.c.b16 %v343, %v342
    %v396 = vpack.c.b16 %v345, %v344
    %v397 = vpack.c.b16 %v347, %v346
    %v398 = vpack.c.b16 %v349, %v348
    %v399 = vpack.c.b16 %v351, %v350
    %448 = vmatprep.subr.bf16.mxu0 0
    %449 = vmatpush1.bf16.msra.mxu0 %v359
    %450 = vmatprep.subr.bf16.mxu0 0
    %451 = vmatpush1.bf16.msra.mxu0 %v358
    %452 = vmatprep.subr.bf16.mxu0 0
    %453 = vmatpush1.bf16.msra.mxu0 %v357
    %454 = vmatprep.subr.bf16.mxu0 0
    %455 = vmatpush1.bf16.msra.mxu0 %v356
    %456 = vmatprep.subr.bf16.mxu0 0
    %457 = vmatpush1.bf16.msra.mxu0 %v355
    %458 = vmatprep.subr.bf16.mxu0 0
    %459 = vmatpush1.bf16.msra.mxu0 %v354
    %460 = vmatprep.subr.bf16.mxu0 0
    %461 = vmatpush1.bf16.msra.mxu0 %v353
    %462 = vmatprep.subr.bf16.mxu0 0
    %463 = vmatpush1.bf16.msra.mxu0 %v352
    %464 = vmatprep.subr.bf16.mxu0 0
    %465 = vmatpush2.bf16.msra.mxu0 %v367
    %466 = vmatprep.subr.bf16.mxu0 0
    %467 = vmatpush2.bf16.msra.mxu0 %v366
    %468 = vmatprep.subr.bf16.mxu0 0
    %469 = vmatpush2.bf16.msra.mxu0 %v365
    %470 = vmatprep.subr.bf16.mxu0 0
    %471 = vmatpush2.bf16.msra.mxu0 %v364
    %472 = vmatprep.subr.bf16.mxu0 0
    %473 = vmatpush2.bf16.msra.mxu0 %v363
    %474 = vmatprep.subr.bf16.mxu0 0
    %475 = vmatpush2.bf16.msra.mxu0 %v362
    %476 = vmatprep.subr.bf16.mxu0 0
    %477 = vmatpush2.bf16.msra.mxu0 %v361
    %478 = vmatprep.subr.bf16.mxu0 0
    %479 = vmatpush2.bf16.msra.mxu0 %v360
    %480 = vmatprep.mubr.bf16.mxu0 %v52
    %481 = vmatmul.mubr.bf16.gmra.mxu0 %v51
    %v482 = vpop.f32.mrf.mxu0
    %v483 = vadd.f32 %v158, %v482
    %v484 = vpop.f32.mrf.mxu0
    %v485 = vpop.f32.mrf.mxu0
    %v486 = vpop.f32.mrf.mxu0
    %487 = vdwg.mxu0
    %488 = vmatprep.subr.bf16.mxu0 0
    %489 = vmatpush1.bf16.msra.mxu0 %v375
    %490 = vmatprep.subr.bf16.mxu0 0
    %491 = vmatpush1.bf16.msra.mxu0 %v374
    %492 = vmatprep.subr.bf16.mxu0 0
    %493 = vmatpush1.bf16.msra.mxu0 %v373
    %494 = vmatprep.subr.bf16.mxu0 0
    %495 = vmatpush1.bf16.msra.mxu0 %v372
    %496 = vmatprep.subr.bf16.mxu0 0
    %497 = vmatpush1.bf16.msra.mxu0 %v371
    %498 = vmatprep.subr.bf16.mxu0 0
    %499 = vmatpush1.bf16.msra.mxu0 %v370
    %500 = vmatprep.subr.bf16.mxu0 0
    %501 = vmatpush1.bf16.msra.mxu0 %v369
    %502 = vmatprep.subr.bf16.mxu0 0
    %503 = vmatpush1.bf16.msra.mxu0 %v368
    %504 = vmatprep.subr.bf16.mxu0 0
    %505 = vmatpush2.bf16.msra.mxu0 %v383
    %506 = vmatprep.subr.bf16.mxu0 0
    %507 = vmatpush2.bf16.msra.mxu0 %v382
    %508 = vmatprep.subr.bf16.mxu0 0
    %509 = vmatpush2.bf16.msra.mxu0 %v381
    %510 = vmatprep.subr.bf16.mxu0 0
    %511 = vmatpush2.bf16.msra.mxu0 %v380
    %512 = vmatprep.subr.bf16.mxu0 0
    %513 = vmatpush2.bf16.msra.mxu0 %v379
    %514 = vmatprep.subr.bf16.mxu0 0
    %515 = vmatpush2.bf16.msra.mxu0 %v378
    %516 = vmatprep.subr.bf16.mxu0 0
    %517 = vmatpush2.bf16.msra.mxu0 %v377
    %518 = vmatprep.subr.bf16.mxu0 0
    %519 = vmatpush2.bf16.msra.mxu0 %v376
    %520 = vmatprep.mubr.bf16.mxu0 %v54
    %521 = vmatmul.mubr.bf16.gmra.mxu0 %v53
    %v522 = vpop.f32.mrf.mxu0
    %v523 = vadd.f32 %v483, %v522
    %v524 = vpop.f32.mrf.mxu0
    %v525 = vpop.f32.mrf.mxu0
    %v526 = vpop.f32.mrf.mxu0
    %527 = vdwg.mxu0
    %528 = vmatprep.subr.bf16.mxu0 0
    %529 = vmatpush1.bf16.msra.mxu0 %v391
    %530 = vmatprep.subr.bf16.mxu0 0
    %531 = vmatpush1.bf16.msra.mxu0 %v390
    %532 = vmatprep.subr.bf16.mxu0 0
    %533 = vmatpush1.bf16.msra.mxu0 %v389
    %534 = vmatprep.subr.bf16.mxu0 0
    %535 = vmatpush1.bf16.msra.mxu0 %v388
    %536 = vmatprep.subr.bf16.mxu0 0
    %537 = vmatpush1.bf16.msra.mxu0 %v387
    %538 = vmatprep.subr.bf16.mxu0 0
    %539 = vmatpush1.bf16.msra.mxu0 %v386
    %540 = vmatprep.subr.bf16.mxu0 0
    %541 = vmatpush1.bf16.msra.mxu0 %v385
    %542 = vmatprep.subr.bf16.mxu0 0
    %543 = vmatpush1.bf16.msra.mxu0 %v384
    %544 = vmatprep.subr.bf16.mxu0 0
    %545 = vmatpush2.bf16.msra.mxu0 %v399
    %546 = vmatprep.subr.bf16.mxu0 0
    %547 = vmatpush2.bf16.msra.mxu0 %v398
    %548 = vmatprep.subr.bf16.mxu0 0
    %549 = vmatpush2.bf16.msra.mxu0 %v397
    %550 = vmatprep.subr.bf16.mxu0 0
    %551 = vmatpush2.bf16.msra.mxu0 %v396
    %552 = vmatprep.subr.bf16.mxu0 0
    %553 = vmatpush2.bf16.msra.mxu0 %v395
    %554 = vmatprep.subr.bf16.mxu0 0
    %555 = vmatpush2.bf16.msra.mxu0 %v394
    %556 = vmatprep.subr.bf16.mxu0 0
    %557 = vmatpush2.bf16.msra.mxu0 %v393
    %558 = vmatprep.subr.bf16.mxu0 0
    %559 = vmatpush2.bf16.msra.mxu0 %v392
    %560 = vmatprep.mubr.bf16.mxu0 %v56
    %561 = vmatmul.mubr.bf16.gmra.mxu0 %v55
    %v562 = vpop.f32.mrf.mxu0
    %v563 = vadd.f32 %v523, %v562
    %v564 = vpop.f32.mrf.mxu0
    %v565 = vpop.f32.mrf.mxu0
    %v566 = vpop.f32.mrf.mxu0
    %567 = vdwg.mxu0
    %vm568 = vcmask 74752
    %569 = vst.msk [vmem:[#allocation2] sm:$0x3] %vm568, %v563
    // Predicated region
    $region14: #{small_fully_c_forward.1} parent=1 // pred_check
      _
    $region15: #{small_fully_c_forward.1} parent=1 // pred_check_branch
      %571 = sbr.rel (0) target = $region17
    $region16: #{small_fully_c_forward.1} parent=1 // pred_region
      %s573 = ssub.s32 32, 32
      %574 = vsyncadd [#allocation3], %s573
      %s576 = sshll.u32 [#allocation2], 4
      %s577 = int_to_ptr.vmem [resolvable:$true] %s576
      %579 = dma.vmem_to_hbm [thread:$0]  %s577, 32, %s3, [#allocation3]
    $region17: #{small_fully_c_forward.1} parent=1 // pred_fallthru
      _
    // Predicated region
    $region18: #{small_fully_c_forward.1} parent=1 // pred_check
      _
    $region19: #{small_fully_c_forward.1} parent=1 // pred_check_branch
      %581 = sbr.rel (0) target = $region21
    $region20: #{small_fully_c_forward.1} parent=1 // pred_region
      %582 = dma.done [#allocation3], 32
    $region21: #{small_fully_c_forward.1} parent=1 // pred_fallthru
      _
    %583 = vsyncpa [#allocation3], 1

</llo_original>
